<compile_context>
chip_gen: v6e
topology: v6e:2x2x1
jax: 0.10.0
libtpu: 0.0.40
codegen_flags: <defaults>
</compile_context>

<pallas_src>
import numpy as np
import jax
import jax.numpy as jnp
from jax.experimental import pallas as pl
from jax.experimental.pallas import tpu as pltpu

BN_EPS = 1e-5
LANE = 128
SUBLANE = 16            # bf16 packing wants multiples of 16 on the second-minor dim


def _round_up(x, m):
    return (x + m - 1) // m * m


def _vmem_capacity_bytes():
    try:
        return int(pltpu.get_tpu_info().vmem_capacity_bytes)
    except Exception:
        return 64 << 20      # conservative (v7x-sized) fallback


def _resident_spec(shape):
    """VMEM-resident block (constant index_map), single-buffered when supported."""
    index_map = lambda i: (0,) * len(shape)
    try:
        return pl.BlockSpec(shape, index_map, pipeline_mode=pl.Buffered(1))
    except Exception:
        return pl.BlockSpec(shape, index_map)


def _fused_input_cell_kernel(p_ref,        # VMEM (TILE_M, K_total_pad) bf16 concatenated patches
                             w_ref,        # VMEM (K_total_pad, C_pad)  bf16 (alpha*BN folded, stacked)
                             bias_ref,     # VMEM (1, C_pad)            f32  (sum_k alpha_k*bias_k)
                             out_ref):     # VMEM (TILE_M, C_pad)       f32
    # Single MXU matmul over the concatenated-K axis: the 4-branch reduction stays
    # inside the MXU accumulation path, and the f32 output block is written once.
    out_ref[...] = (jnp.dot(p_ref[...], w_ref[...],
                            preferred_element_type=jnp.float32)
                    + bias_ref[...])


class InputCellPallas:
    STRIDES = (8, 4, 2, 1)     # spatial part of stride_sizes [(1,8,8), (1,4,4), (1,2,2), (1,1,1)]
    KERNELS = (9, 5, 3, 3)     # spatial part of kernel_sizes [(1,9,9), (1,5,5), (1,3,3), (1,3,3)]
    PAD = 1                    # spatial part of padding_size (0,1,1)

    def __init__(self, channels, num_segments, key):
        self.channels = list(channels)
        self.num_segments = num_segments
        self.c_out = channels[-1]
        self.c_pad = _round_up(self.c_out, LANE)
        self.k_dims = [k * k * c for c, k in zip(self.channels, self.KERNELS)]
        self.k_total = sum(self.k_dims)
        self.k_total_pad = _round_up(self.k_total, LANE)

        cpad = self.c_pad - self.c_out
        w_mats, w_cpad, bn_scale, bn_bias = [], [], [], []
        for idx, (c_in, k) in enumerate(zip(self.channels, self.KERNELS)):
            kw_, kg, kb, km, kv = jax.random.split(jax.random.fold_in(key, idx), 5)
            # torch Conv3d weight layout (C_out, C_in, 1, kh, kw), bias=False
            w = jax.random.normal(kw_, (self.c_out, c_in, 1, k, k), jnp.float32) * 0.05
            gamma = jax.random.uniform(kg, (self.c_out,), jnp.float32, 0.5, 1.5)
            beta = jax.random.normal(kb, (self.c_out,), jnp.float32) * 0.1
            mean = jax.random.normal(km, (self.c_out,), jnp.float32) * 0.1
            var = jax.random.uniform(kv, (self.c_out,), jnp.float32, 0.5, 1.5)
            # OIDHW -> (kh, kw, c_in, c_out) -> (k*k*c_in, c_out), matching patch flattening order
            w_mat = jnp.transpose(w[:, :, 0], (2, 3, 1, 0)).reshape(k * k * c_in, self.c_out)
            scale = gamma / jnp.sqrt(var + BN_EPS)
            w_mats.append(w_mat)
            w_cpad.append(jnp.pad(w_mat, ((0, 0), (0, cpad))))     # (K_k, C_pad) f32, unscaled
            bn_scale.append(scale)
            bn_bias.append(beta - mean * scale)
        self.w_mats = w_mats                      # unpadded f32, used by the reference
        self.w_cpad = w_cpad                      # column-padded f32, folded per-call with alpha*scale
        self.scales = jnp.stack(bn_scale)         # (4, C_out)
        self.biases = jnp.stack(bn_bias)          # (4, C_out)
        self.scales_pad = jnp.pad(self.scales, ((0, 0), (0, cpad)))
        self.biases_pad = jnp.pad(self.biases, ((0, 0), (0, cpad)))

        # Generation-aware VMEM model (v5e/v6e: 128 MiB physical, v7x: 64 MiB).
        cap = _vmem_capacity_bytes()
        if cap >= (100 << 20):
            self._vmem_budget = 96 << 20
            self._vmem_limit_cap = 112 << 20
        else:
            self._vmem_budget = max(cap - (12 << 20), 24 << 20)     # ~52 MiB on v7x
            self._vmem_limit_cap = max(cap - (8 << 20), 28 << 20)   # ~56 MiB on v7x

    # ----- glue (reshapes / gathers), faithful to the torch forward -----
    def _preprocess(self, x):
        """(N*T, C, H, W) -> (N, C, T, H, W); pad T 3->4 like F.pad(..., (0,0,0,0,0,1))."""
        nt, c, h, w = x.shape
        n = nt // self.num_segments
        p = x.reshape(n, self.num_segments, c, h, w).transpose(0, 2, 1, 3, 4)
        if p.shape[2] == 3:
            p = jnp.pad(p, ((0, 0), (0, 0), (0, 1), (0, 0), (0, 0)))
        return p

    @staticmethod
    def _im2col(frames, k, s, pad):
        """frames (B, H, W, C) -> (B*Ho*Wo, k*k*C) flattened in (kh, kw, c) order."""
        b, h, w, c = frames.shape
        ho = (h + 2 * pad - k) // s + 1
        wo = (w + 2 * pad - k) // s + 1
        xp = jnp.pad(frames, ((0, 0), (pad, pad), (pad, pad), (0, 0)))
        cols = []
        for kh in range(k):
            for kw in range(k):
                cols.append(xp[:, kh:kh + s * (ho - 1) + 1:s,
                               kw:kw + s * (wo - 1) + 1:s, :])
        patches = jnp.stack(cols, axis=3)                 # (B, Ho, Wo, k*k, C)
        return patches.reshape(b * ho * wo, k * k * c), ho, wo

    # ----- VMEM budgeting: largest M-tile that fits the generation-aware budget -----
    def _pick_tile(self, m_aligned):
        # Weights/bias: single-buffered residents (constant index_map + Buffered(1)).
        w_bytes = self.k_total_pad * self.c_pad * 2          # bf16
        bias_bytes = self.c_pad * 4
        tile = SUBLANE
        for cand in (4096, 2048, 1024, 512, 256, 128, 64, 32, 16):
            stream = 2 * cand * self.k_total_pad * 2 + 2 * cand * self.c_pad * 4
            if w_bytes + bias_bytes + stream <= self._vmem_budget:
                tile = cand
                break
        tile = min(tile, m_aligned)
        # Keep >= ~4 grid steps when M allows (2 TCs on v7x + something to overlap).
        min_steps_tile = max(SUBLANE, _round_up(pl.cdiv(m_aligned, 4), SUBLANE))
        tile = max(SUBLANE, min(tile, min_steps_tile))
        est = (w_bytes + bias_bytes
               + 2 * tile * self.k_total_pad * 2 + 2 * tile * self.c_pad * 4)
        return tile, est

    # ----- forward (hot path in the Pallas kernel) -----
    def forward(self, inputs, input_alphas):
        assert len(inputs) == 4 and input_alphas.shape == (4,)
        alphas = input_alphas.astype(jnp.float32)

        patches_raw, out_hw, nt_shape = [], None, None
        for k, x in enumerate(inputs):
            p = self._preprocess(x)                       # (N, C, T, H, W)
            n, c, t, h, w = p.shape
            frames = p.transpose(0, 2, 3, 4, 1).reshape(n * t, h, w, c)   # (B, H, W, C)
            # ReLU + bf16 cast BEFORE im2col: avoids k*k-redundant VPU work in the
            # kernel and halves the HBM bytes of the materialized patch matrices.
            frames = jnp.maximum(frames, 0.0).astype(jnp.bfloat16)
            pk, ho, wo = self._im2col(frames, self.KERNELS[k], self.STRIDES[k], self.PAD)
            if out_hw is None:
                out_hw, nt_shape = (ho, wo), (n, t)
            assert (ho, wo) == out_hw and (n, t) == nt_shape, \
                "all ops must produce the same output resolution"
            patches_raw.append(pk)

        n, t = nt_shape
        ho, wo = out_hw
        m = n * t * ho * wo
        m_aligned = _round_up(m, SUBLANE)
        tile_m, est_bytes = self._pick_tile(m_aligned)
        m_pad = _round_up(m, tile_m)
        grid = (m_pad // tile_m,)

        # One concatenated-K patch stream (exact: the K/M tail padding is zero and
        # the corresponding weight rows are zero).
        patches = jnp.concatenate(patches_raw, axis=1)                  # (M, K_total) bf16
        patches = jnp.pad(patches, ((0, m_pad - m),
                                    (0, self.k_total_pad - self.k_total)))

        # Fold alpha_k * BN-scale_k into each branch's weight rows, stack along K;
        # pre-sum alpha_k * BN-bias_k into a single (1, C_pad) bias row.
        w_folded = jnp.concatenate(
            [self.w_cpad[k] * (alphas[k] * self.scales_pad[k])[None, :]
             for k in range(4)], axis=0)                                # (K_total, C_pad) f32
        w_folded = jnp.pad(w_folded,
                           ((0, self.k_total_pad - self.k_total), (0, 0))
                           ).astype(jnp.bfloat16)
        bias_total = jnp.sum(alphas[:, None] * self.biases_pad,
                             axis=0).reshape(1, self.c_pad).astype(jnp.float32)

        in_specs = [
            pl.BlockSpec((tile_m, self.k_total_pad), lambda i: (i, 0)),   # patches: streamed
            _resident_spec((self.k_total_pad, self.c_pad)),               # weights: resident, 1-buffer
            _resident_spec((1, self.c_pad)),                              # bias: resident, 1-buffer
        ]
        out_specs = pl.BlockSpec((tile_m, self.c_pad), lambda i: (i, 0))

        vmem_limit = int(min(max(est_bytes * 5 // 4, 16 << 20), self._vmem_limit_cap))

        out_flat = pl.pallas_call(
            _fused_input_cell_kernel,
            grid=grid,
            out_shape=jax.ShapeDtypeStruct((m_pad, self.c_pad), jnp.float32),
            in_specs=in_specs,
            out_specs=out_specs,
            compiler_params=pltpu.CompilerParams(
                dimension_semantics=("parallel",),      # megacore sharding on v7x
                vmem_limit_bytes=vmem_limit),
        )(patches, w_folded, bias_total)

        # (M_pad, C_pad) -> slice padding -> (N, C_out, T, Ho, Wo)  (NCTHW, like the module)
        out = out_flat[:m, :self.c_out]
        return out.reshape(n, t, ho, wo, self.c_out).transpose(0, 4, 1, 2, 3)

    # ----- pure-JAX f32 reference (lax.conv) for a correctness check -----
    def reference(self, inputs, input_alphas):
        acc, n, t = None, None, None
        for k, x in enumerate(inputs):
            p = self._preprocess(x)
            n, c, t, h, w = p.shape
            frames = jnp.maximum(p.transpose(0, 2, 3, 4, 1).reshape(n * t, h, w, c), 0.0)
            kk, s = self.KERNELS[k], self.STRIDES[k]
            w_hwio = self.w_mats[k].reshape(kk, kk, c, self.c_out)
            y = jax.lax.conv_general_dilated(
                frames, w_hwio, window_strides=(s, s),
                padding=((self.PAD, self.PAD), (self.PAD, self.PAD)),
                dimension_numbers=('NHWC', 'HWIO', 'NHWC'))
            y = y * self.scales[k] + self.biases[k]
            y = input_alphas[k] * y
            acc = y if acc is None else acc + y
        _, ho, wo, _ = acc.shape
        return acc.reshape(n, t, ho, wo, self.c_out).transpose(0, 4, 1, 2, 3)


if __name__ == "__main__":
    key = jax.random.PRNGKey(0)
    channels = [4, 8, 16, 32]          # small stand-in for resnet18's [64,128,256,512]
    num_segments = 4
    n_videos = 2
    spatials = [32, 16, 8, 4]          # resnet-style pyramid; every op lands on 4x4

    cell = InputCellPallas(channels, num_segments, jax.random.fold_in(key, 100))

    inputs = []
    for i, (c, hw) in enumerate(zip(channels, spatials)):
        inputs.append(jax.random.normal(jax.random.fold_in(key, i),
                                        (n_videos * num_segments, c, hw, hw),
                                        jnp.float32))
    alphas = jax.nn.softmax(jax.random.normal(jax.random.fold_in(key, 50), (4,)))

    out = jax.block_until_ready(cell.forward(inputs, alphas))
    assert out.shape == (n_videos, channels[-1], num_segments, 4, 4), out.shape

    ref = jax.block_until_ready(cell.reference(inputs, alphas))
    np.testing.assert_allclose(np.asarray(out), np.asarray(ref), rtol=5e-2, atol=2e-2)

    print("KERNEL_OK")
</pallas_src>

<mosaic_0001>
module attributes {stable_mosaic.version = 11 : i64} {
  func.func @_fused_input_cell_kernel(%arg0: i32, %arg1: memref<32x1024xbf16, #tpu.memory_space<vmem>>, %arg2: memref<1024x128xbf16, #tpu.memory_space<vmem>>, %arg3: memref<1x128xf32, #tpu.memory_space<vmem>>, %arg4: memref<32x128xf32, #tpu.memory_space<vmem>>) attributes {dimension_semantics = [#tpu.dimension_semantics<parallel>], iteration_bounds = array<i64: 4>, scalar_prefetch = 0 : i64, scratch_operands = 0 : i64, tpu.core_type = #tpu.core_type<tc>, window_params = [{transform_indices = @transform_0, window_bounds = array<i64: 32, 1024>}, {pipeline_mode = #tpu.pipeline_mode<synchronous>, transform_indices = @transform_1, window_bounds = array<i64: 1024, 128>}, {pipeline_mode = #tpu.pipeline_mode<synchronous>, transform_indices = @transform_2, window_bounds = array<i64: 1, 128>}, {transform_indices = @transform_3, window_bounds = array<i64: 32, 128>}]} {
    %c0 = arith.constant 0 : index
    %c0_0 = arith.constant 0 : index
    %0 = vector.load %arg1[%c0, %c0_0] : memref<32x1024xbf16, #tpu.memory_space<vmem>>, vector<32x1024xbf16>
    %c0_1 = arith.constant 0 : index
    %c0_2 = arith.constant 0 : index
    %1 = vector.load %arg2[%c0_1, %c0_2] : memref<1024x128xbf16, #tpu.memory_space<vmem>>, vector<1024x128xbf16>
    %cst = arith.constant dense<0.000000e+00> : vector<32x128xf32>
    %2 = tpu.matmul %0, %1, %cst {dimension_numbers = #tpu.dot_dimension_numbers<[1], [0], [0], [1], [0, 0, 1, 1], [], []>} : vector<32x1024xbf16>, vector<1024x128xbf16>, vector<32x128xf32> -> vector<32x128xf32>
    %c0_3 = arith.constant 0 : index
    %c0_4 = arith.constant 0 : index
    %3 = vector.load %arg3[%c0_3, %c0_4] : memref<1x128xf32, #tpu.memory_space<vmem>>, vector<1x128xf32>
    %4 = vector.broadcast %3 : vector<1x128xf32> to vector<32x128xf32>
    %5 = arith.addf %2, %4 : vector<32x128xf32>
    %c0_5 = arith.constant 0 : index
    %c0_6 = arith.constant 0 : index
    %6 = vector.load %arg4[%c0_5, %c0_6] : memref<32x128xf32, #tpu.memory_space<vmem>>, vector<32x128xf32>
    tpu.vector_store %arg4[%c0_5, %c0_6], %5 {strides = array<i32>} : memref<32x128xf32, #tpu.memory_space<vmem>>, vector<32x128xf32>,
    return
  }
  func.func @transform_0(%arg0: i32) -> (i32, i32) {
    %c0_i32 = arith.constant 0 : i32
    %c0_i32_0 = arith.constant 0 : i32
    return %arg0, %c0_i32 : i32, i32
  }
  func.func @transform_1(%arg0: i32) -> (i32, i32) {
    %c0_i32 = arith.constant 0 : i32
    %c0_i32_0 = arith.constant 0 : i32
    %c0_i32_1 = arith.constant 0 : i32
    return %c0_i32, %c0_i32_0 : i32, i32
  }
  func.func @transform_2(%arg0: i32) -> (i32, i32) {
    %c0_i32 = arith.constant 0 : i32
    %c0_i32_0 = arith.constant 0 : i32
    %c0_i32_1 = arith.constant 0 : i32
    return %c0_i32, %c0_i32_0 : i32, i32
  }
  func.func @transform_3(%arg0: i32) -> (i32, i32) {
    %c0_i32 = arith.constant 0 : i32
    %c0_i32_0 = arith.constant 0 : i32
    return %arg0, %c0_i32 : i32, i32
  }
}

</mosaic_0001>

<llo_original>
// kernel: tpu_custom_call.1
$region0: #{tpu_custom_call.1}
  #allocation0 [shape = 'u32[]', space=smem, size = 0x4, offset = 0x4, fixed_abs, tag = 'smem constant byte address 0x4 - core index']
  #allocation1 [shape = 'u32[144,128]{1,0:T(1,128)}', space=vmem, size = 0x12000, scoped, tag = 'internal scratch']
  %s0 = inlined_call_operand.hbm [shape: bf16[128,1024], index: 0, kind: input, shape index: {}]
  %s1 = inlined_call_operand.hbm [shape: bf16[1024,128], index: 1, kind: input, shape index: {}]
  %s2 = inlined_call_operand.vmem [shape: f32[1,128], index: 2, kind: input, shape index: {}]
  %s3 = inlined_call_operand.hbm [shape: f32[128,128], index: 3, kind: output, shape index: {}]
  %s4 = sld [smem:[#allocation0]]
  $region53: #{tpu_custom_call.1} parent=0
    _
  %s6 = ssub.s32 1, %s4
  %s7 = scalar_select 0, %s6, %s4
  $region1: #{tpu_custom_call.1} parent=0
    #allocation2 [shape = 'u8[131072]{0}', space=vmem, size = 0x20000, scoped, tag = 'input window, operand 0']
    #allocation3 [shape = 's32[2]{0}', space=sflag, size = 0x8, scoped, tag = 'scoped memory for tpu_custom_call.1']
    #allocation4 [shape = 's32[2]{0}', space=sflag, size = 0x8, scoped, tag = 'scoped memory for tpu_custom_call.1']
    #allocation5 [shape = 'u8[262144]{0}', space=vmem, size = 0x40000, scoped, tag = 'input window, operand 1, single buffered']
    #allocation6 [shape = 's32[1]{0}', space=sflag, size = 0x4, scoped, tag = 'scoped memory for tpu_custom_call.1']
    #allocation7 [shape = 'u8[32768]{0}', space=vmem, size = 0x8000, scoped, tag = 'output window, operand 0']
    %8 = vsyncpa [#allocation3], 0
    %s9 = scalar_lea.sflag [#allocation3], 1
    %10 = vsyncpa %s9, 0
    %11 = vsyncpa [#allocation6], 0
    %12 = vsyncpa [#allocation4], 0
    %s13 = scalar_lea.sflag [#allocation4], 1
    %14 = vsyncpa %s13, 0
    loop: start=0, step=1, limit=6
    $region2: #{tpu_custom_call.1} parent=1 // loop_pre_header
      _
    $region3: #{tpu_custom_call.1} parent=1 // loop_header
      %s16 = sphi 0, %s20
      %p17 = scmp.ge.s32.totalorder %s16, 6
      %s26 = sphi 0, %s28
      %s29 = sphi 0, %s26
      %s30 = sphi 0, %s29
      %s46 = sphi 0, %s30
      %s50 = sphi 0, %s50
      %s52 = sphi 0, %s50
      %s53 = sphi 0, %s52
      %s67 = sphi 0, %s53
      %s71 = sphi 0, %s71
      %s73 = sphi 0, %s71
      %s74 = sphi 0, %s73
      %s88 = sphi 0, %s74
      %s94 = sphi 0, %s96
      %s97 = sphi 0, %s94
      %s98 = sphi 0, %s97
      %s114 = sphi 0, %s98
    $region4: #{tpu_custom_call.1} parent=1 // loop_header_branch
      %19 = sbr.rel (%p17) target = $region8
    $region5: #{tpu_custom_call.1} parent=1 // loop_body
      %s21 = ssub.s32 %s16, 1
      %s22 = ssub.s32 %s16, 2
      %s23 = sadd.s32 %s16, 1
      %s24 = ssub.s32 %s16, %s23
      %p25 = scmp.eq.s32.totalorder %s24, 0
      %s27 = sadd.s32 %s26, 1
      %s28 = scalar_select %p25, %s26, %s27
      %p31 = pneg %p25
      %p32 = scmp.eq.s32.totalorder %s16, 3
      %p33 = por %p31, %p32
      %p34 = scmp.ne.s32.totalorder %s26, %s29
      %p35 = scmp.eq.s32.totalorder %s16, 0
      %p36 = por %p34, %p35
      %p37 = scmp.ne.s32.totalorder %s26, %s29
      %p38 = scmp.eq.s32.totalorder %s21, 3
      %p39 = por %p37, %p38
      %p40 = scmp.ne.s32.totalorder %s29, %s30
      %p41 = scmp.eq.s32.totalorder %s21, 0
      %p42 = por %p40, %p41
      %p43 = scmp.ne.s32.totalorder %s29, %s30
      %p44 = scmp.eq.s32.totalorder %s22, 3
      %p45 = por %p43, %p44
      %p47 = scmp.ne.s32.totalorder %s30, %s46
      %p48 = scmp.eq.s32.totalorder %s22, 0
      %p49 = por %p47, %p48
      %s51 = sadd.s32 %s50, 1
      %p54 = scmp.eq.s32.totalorder %s16, 3
      %p55 = scmp.ne.s32.totalorder %s50, %s52
      %p56 = scmp.eq.s32.totalorder %s16, 0
      %p57 = por %p55, %p56
      %p58 = scmp.ne.s32.totalorder %s50, %s52
      %p59 = scmp.eq.s32.totalorder %s21, 3
      %p60 = por %p58, %p59
      %p61 = scmp.ne.s32.totalorder %s52, %s53
      %p62 = scmp.eq.s32.totalorder %s21, 0
      %p63 = por %p61, %p62
      %p64 = scmp.ne.s32.totalorder %s52, %s53
      %p65 = scmp.eq.s32.totalorder %s22, 3
      %p66 = por %p64, %p65
      %p68 = scmp.ne.s32.totalorder %s53, %s67
      %p69 = scmp.eq.s32.totalorder %s22, 0
      %p70 = por %p68, %p69
      %s72 = sadd.s32 %s71, 1
      %p75 = scmp.eq.s32.totalorder %s16, 3
      %p76 = scmp.ne.s32.totalorder %s71, %s73
      %p77 = scmp.eq.s32.totalorder %s16, 0
      %p78 = por %p76, %p77
      %p79 = scmp.ne.s32.totalorder %s71, %s73
      %p80 = scmp.eq.s32.totalorder %s21, 3
      %p81 = por %p79, %p80
      %p82 = scmp.ne.s32.totalorder %s73, %s74
      %p83 = scmp.eq.s32.totalorder %s21, 0
      %p84 = por %p82, %p83
      %p85 = scmp.ne.s32.totalorder %s73, %s74
      %p86 = scmp.eq.s32.totalorder %s22, 3
      %p87 = por %p85, %p86
      %p89 = scmp.ne.s32.totalorder %s74, %s88
      %p90 = scmp.eq.s32.totalorder %s22, 0
      %p91 = por %p89, %p90
      %s92 = ssub.s32 %s16, %s23
      %p93 = scmp.eq.s32.totalorder %s92, 0
      %s95 = sadd.s32 %s94, 1
      %s96 = scalar_select %p93, %s94, %s95
      %p99 = pneg %p93
      %p100 = scmp.eq.s32.totalorder %s16, 3
      %p101 = por %p99, %p100
      %p102 = scmp.ne.s32.totalorder %s94, %s97
      %p103 = scmp.eq.s32.totalorder %s16, 0
      %p104 = por %p102, %p103
      %p105 = scmp.ne.s32.totalorder %s94, %s97
      %p106 = scmp.eq.s32.totalorder %s21, 3
      %p107 = por %p105, %p106
      %p108 = scmp.ne.s32.totalorder %s97, %s98
      %p109 = scmp.eq.s32.totalorder %s21, 0
      %p110 = por %p108, %p109
      %p111 = scmp.ne.s32.totalorder %s97, %s98
      %p112 = scmp.eq.s32.totalorder %s22, 3
      %p113 = por %p111, %p112
      %p115 = scmp.ne.s32.totalorder %s98, %s114
      %p116 = scmp.eq.s32.totalorder %s22, 0
      %p117 = por %p115, %p116
      %p118 = scmp.le.s32.totalorder 1, %s16
      %p119 = scmp.lt.s32.totalorder %s16, 5
      %p120 = pnand %p118, %p119
      %p121 = pneg %p120
      // Predicated region
      $region9: #{tpu_custom_call.1} parent=5 // pred_check
        _
      $region10: #{tpu_custom_call.1} parent=5 // pred_check_branch
        %123 = sbr.rel (%p120) target = $region12
      $region11: #{tpu_custom_call.1} parent=5 // pred_region
        %s124 = ssub.s32 %s16, 1
        // Predicated region
        $region13: #{tpu_custom_call.1} parent=11 // pred_check
          %p125 = pneg %p63
        $region14: #{tpu_custom_call.1} parent=11 // pred_check_branch
          %127 = sbr.rel (%p125) target = $region16
        $region15: #{tpu_custom_call.1} parent=11 // pred_region
          %s129 = ssub.s32 8192, 8192
          %130 = vsyncadd [#allocation6], %s129
          %s131 = sshll.u32 [#allocation5], 4
          %s132 = int_to_ptr.vmem [resolvable:$true] %s131
          %137 = dma.hbm_to_vmem [thread:$0]  %s1, 8192, %s132, [#allocation6], 64, 64, 4
        $region16: #{tpu_custom_call.1} parent=11 // pred_fallthru
          _
        // Predicated region
        $region17: #{tpu_custom_call.1} parent=11 // pred_check
          %p138 = pneg %p84
        $region18: #{tpu_custom_call.1} parent=11 // pred_check_branch
          %140 = sbr.rel (%p138) target = $region20
        $region19: #{tpu_custom_call.1} parent=11 // pred_region
          _
        $region20: #{tpu_custom_call.1} parent=11 // pred_fallthru
          _
      $region12: #{tpu_custom_call.1} parent=5 // pred_fallthru
        _
      %p141 = scmp.lt.s32.totalorder %s16, 4
      // Predicated region
      $region21: #{tpu_custom_call.1} parent=5 // pred_check
        %p142 = pneg %p141
      $region22: #{tpu_custom_call.1} parent=5 // pred_check_branch
        %144 = sbr.rel (%p142) target = $region24
      $region23: #{tpu_custom_call.1} parent=5 // pred_region
        // Predicated region
        $region25: #{tpu_custom_call.1} parent=23 // pred_check
          %p145 = pneg %p36
        $region26: #{tpu_custom_call.1} parent=23 // pred_check_branch
          %147 = sbr.rel (%p145) target = $region28
        $region27: #{tpu_custom_call.1} parent=23 // pred_region
          %s148 = sand.u32 %s26, 1
          %s149 = scalar_lea.sflag [#allocation3], %s148
          %s150 = sand.u32 %s26, 1
          %s151 = smul.addr %s150, 128
          %s152 = scalar_lea.vmem [#allocation2], %s151
          %s153 = smul.u32 4, %s16
          %s155 = ssub.s32 2048, 2048
          %156 = vsyncadd %s149, %s155
          %s157 = smul.addr %s153, 8
          %s158 = smul.addr %s157, 64
          %s159 = scalar_lea.hbm %s0, %s158
          %s160 = sshll.u32 %s152, 4
          %s161 = int_to_ptr.vmem [resolvable:$true] %s160
          %166 = dma.hbm_to_vmem [thread:$0]  %s159, 2048, %s161, %s149, 512, 512, 32
        $region28: #{tpu_custom_call.1} parent=23 // pred_fallthru
          _
      $region24: #{tpu_custom_call.1} parent=5 // pred_fallthru
        _
      %p167 = scmp.le.s32.totalorder 1, %s16
      %p168 = scmp.lt.s32.totalorder %s16, 5
      %p169 = pnand %p167, %p168
      %p170 = pneg %p169
      // Predicated region
      $region29: #{tpu_custom_call.1} parent=5 // pred_check
        _
      $region30: #{tpu_custom_call.1} parent=5 // pred_check_branch
        %172 = sbr.rel (%p169) target = $region32
      $region31: #{tpu_custom_call.1} parent=5 // pred_region
        %s173 = ssub.s32 %s16, 1
        %s174 = sand.u32 %s29, 1
        %s175 = scalar_lea.sflag [#allocation3], %s174
        %s176 = sand.u32 %s29, 1
        %s177 = smul.addr %s176, 128
        %s178 = scalar_lea.vmem [#allocation2], %s177
        // Predicated region
        $region33: #{tpu_custom_call.1} parent=31 // pred_check
          %p179 = pneg %p42
        $region34: #{tpu_custom_call.1} parent=31 // pred_check_branch
          %181 = sbr.rel (%p179) target = $region36
        $region35: #{tpu_custom_call.1} parent=31 // pred_region
          %182 = dma.done %s175, 2048
        $region36: #{tpu_custom_call.1} parent=31 // pred_fallthru
          _
        // Predicated region
        $region37: #{tpu_custom_call.1} parent=31 // pred_check
          %p183 = pneg %p63
        $region38: #{tpu_custom_call.1} parent=31 // pred_check_branch
          %185 = sbr.rel (%p183) target = $region40
        $region39: #{tpu_custom_call.1} parent=31 // pred_region
          %186 = dma.done [#allocation6], 8192
        $region40: #{tpu_custom_call.1} parent=31 // pred_fallthru
          _
        %s187 = sand.u32 %s29, 1
        %s188 = scalar_lea.sflag [#allocation3], %s187
        %s189 = sand.u32 %s29, 1
        %s190 = smul.addr %s189, 128
        %s191 = scalar_lea.vmem [#allocation2], %s190
        %p192 = pneg %p42
        %p193 = pneg %p39
        %p194 = pneg %p63
        %p195 = pneg %p60
        %p196 = pneg %p84
        %p197 = pneg %p81
        %p198 = pneg %p110
        %p199 = pneg %p107
        %s200 = sand.u32 %s97, 1
        %s201 = scalar_lea.sflag [#allocation4], %s200
        %s202 = sand.u32 %s97, 1
        %s203 = smul.addr %s202, 32
        %s204 = scalar_lea.vmem [#allocation7], %s203
        %s205 = smul.u32 4, %s21
        %s206 = smul.u32 4, %s21
        %v208 = vld [vmem:[%s178] sm:$0xff]
        %v209 = vld [vmem:[%s178 + $0x8] sm:$0xff]
        %v210 = vld [vmem:[%s178 + $0x10] sm:$0xff]
        %v211 = vld [vmem:[%s178 + $0x18] sm:$0xff]
        %v212 = vld [vmem:[%s178 + $0x20] sm:$0xff]
        %v213 = vld [vmem:[%s178 + $0x28] sm:$0xff]
        %v214 = vld [vmem:[%s178 + $0x30] sm:$0xff]
        %v215 = vld [vmem:[%s178 + $0x38] sm:$0xff]
        %v216 = vld [vmem:[%s178 + $0x40] sm:$0xff]
        %v217 = vld [vmem:[%s178 + $0x48] sm:$0xff]
        %v218 = vld [vmem:[%s178 + $0x50] sm:$0xff]
        %v219 = vld [vmem:[%s178 + $0x58] sm:$0xff]
        %v220 = vld [vmem:[%s178 + $0x60] sm:$0xff]
        %v221 = vld [vmem:[%s178 + $0x68] sm:$0xff]
        %v222 = vld [vmem:[%s178 + $0x70] sm:$0xff]
        %v223 = vld [vmem:[%s178 + $0x78] sm:$0xff]
        %v224 = vld [vmem:[#allocation5] sm:$0xf]
        %v225 = vld [vmem:[#allocation5 + $0x4] sm:$0xf]
        %v226 = vld [vmem:[#allocation5 + $0x8] sm:$0xf]
        %v227 = vld [vmem:[#allocation5 + $0xc] sm:$0xf]
        %v228 = vld [vmem:[#allocation5 + $0x10] sm:$0xf]
        %v229 = vld [vmem:[#allocation5 + $0x14] sm:$0xf]
        %v230 = vld [vmem:[#allocation5 + $0x18] sm:$0xf]
        %v231 = vld [vmem:[#allocation5 + $0x1c] sm:$0xf]
        %v232 = vld [vmem:[#allocation5 + $0x20] sm:$0xf]
        %v233 = vld [vmem:[#allocation5 + $0x24] sm:$0xf]
        %v234 = vld [vmem:[#allocation5 + $0x28] sm:$0xf]
        %v235 = vld [vmem:[#allocation5 + $0x2c] sm:$0xf]
        %v236 = vld [vmem:[#allocation5 + $0x30] sm:$0xf]
        %v237 = vld [vmem:[#allocation5 + $0x34] sm:$0xf]
        %v238 = vld [vmem:[#allocation5 + $0x38] sm:$0xf]
        %v239 = vld [vmem:[#allocation5 + $0x3c] sm:$0xf]
        %v240 = vld [vmem:[#allocation5 + $0x40] sm:$0xf]
        %v241 = vld [vmem:[#allocation5 + $0x44] sm:$0xf]
        %v242 = vld [vmem:[#allocation5 + $0x48] sm:$0xf]
        %v243 = vld [vmem:[#allocation5 + $0x4c] sm:$0xf]
        %v244 = vld [vmem:[#allocation5 + $0x50] sm:$0xf]
        %v245 = vld [vmem:[#allocation5 + $0x54] sm:$0xf]
        %v246 = vld [vmem:[#allocation5 + $0x58] sm:$0xf]
        %v247 = vld [vmem:[#allocation5 + $0x5c] sm:$0xf]
        %v248 = vld [vmem:[#allocation5 + $0x60] sm:$0xf]
        %v249 = vld [vmem:[#allocation5 + $0x64] sm:$0xf]
        %v250 = vld [vmem:[#allocation5 + $0x68] sm:$0xf]
        %v251 = vld [vmem:[#allocation5 + $0x6c] sm:$0xf]
        %v252 = vld [vmem:[#allocation5 + $0x70] sm:$0xf]
        %v253 = vld [vmem:[#allocation5 + $0x74] sm:$0xf]
        %v254 = vld [vmem:[#allocation5 + $0x78] sm:$0xf]
        %v255 = vld [vmem:[#allocation5 + $0x7c] sm:$0xf]
        %v256 = vld [vmem:[#allocation5 + $0x80] sm:$0xf]
        %v257 = vld [vmem:[#allocation5 + $0x84] sm:$0xf]
        %v258 = vld [vmem:[#allocation5 + $0x88] sm:$0xf]
        %v259 = vld [vmem:[#allocation5 + $0x8c] sm:$0xf]
        %v260 = vld [vmem:[#allocation5 + $0x90] sm:$0xf]
        %v261 = vld [vmem:[#allocation5 + $0x94] sm:$0xf]
        %v262 = vld [vmem:[#allocation5 + $0x98] sm:$0xf]
        %v263 = vld [vmem:[#allocation5 + $0x9c] sm:$0xf]
        %v264 = vld [vmem:[#allocation5 + $0xa0] sm:$0xf]
        %v265 = vld [vmem:[#allocation5 + $0xa4] sm:$0xf]
        %v266 = vld [vmem:[#allocation5 + $0xa8] sm:$0xf]
        %v267 = vld [vmem:[#allocation5 + $0xac] sm:$0xf]
        %v268 = vld [vmem:[#allocation5 + $0xb0] sm:$0xf]
        %v269 = vld [vmem:[#allocation5 + $0xb4] sm:$0xf]
        %v270 = vld [vmem:[#allocation5 + $0xb8] sm:$0xf]
        %v271 = vld [vmem:[#allocation5 + $0xbc] sm:$0xf]
        %v272 = vld [vmem:[#allocation5 + $0xc0] sm:$0xf]
        %v273 = vld [vmem:[#allocation5 + $0xc4] sm:$0xf]
        %v274 = vld [vmem:[#allocation5 + $0xc8] sm:$0xf]
        %v275 = vld [vmem:[#allocation5 + $0xcc] sm:$0xf]
        %v276 = vld [vmem:[#allocation5 + $0xd0] sm:$0xf]
        %v277 = vld [vmem:[#allocation5 + $0xd4] sm:$0xf]
        %v278 = vld [vmem:[#allocation5 + $0xd8] sm:$0xf]
        %v279 = vld [vmem:[#allocation5 + $0xdc] sm:$0xf]
        %v280 = vld [vmem:[#allocation5 + $0xe0] sm:$0xf]
        %v281 = vld [vmem:[#allocation5 + $0xe4] sm:$0xf]
        %v282 = vld [vmem:[#allocation5 + $0xe8] sm:$0xf]
        %v283 = vld [vmem:[#allocation5 + $0xec] sm:$0xf]
        %v284 = vld [vmem:[#allocation5 + $0xf0] sm:$0xf]
        %v285 = vld [vmem:[#allocation5 + $0xf4] sm:$0xf]
        %v286 = vld [vmem:[#allocation5 + $0xf8] sm:$0xf]
        %v287 = vld [vmem:[#allocation5 + $0xfc] sm:$0xf]
        %v288 = vld [vmem:[#allocation5 + $0x100] sm:$0xf]
        %v289 = vld [vmem:[#allocation5 + $0x104] sm:$0xf]
        %v290 = vld [vmem:[#allocation5 + $0x108] sm:$0xf]
        %v291 = vld [vmem:[#allocation5 + $0x10c] sm:$0xf]
        %v292 = vld [vmem:[#allocation5 + $0x110] sm:$0xf]
        %v293 = vld [vmem:[#allocation5 + $0x114] sm:$0xf]
        %v294 = vld [vmem:[#allocation5 + $0x118] sm:$0xf]
        %v295 = vld [vmem:[#allocation5 + $0x11c] sm:$0xf]
        %v296 = vld [vmem:[#allocation5 + $0x120] sm:$0xf]
        %v297 = vld [vmem:[#allocation5 + $0x124] sm:$0xf]
        %v298 = vld [vmem:[#allocation5 + $0x128] sm:$0xf]
        %v299 = vld [vmem:[#allocation5 + $0x12c] sm:$0xf]
        %v300 = vld [vmem:[#allocation5 + $0x130] sm:$0xf]
        %v301 = vld [vmem:[#allocation5 + $0x134] sm:$0xf]
        %v302 = vld [vmem:[#allocation5 + $0x138] sm:$0xf]
        %v303 = vld [vmem:[#allocation5 + $0x13c] sm:$0xf]
        %v304 = vld [vmem:[#allocation5 + $0x140] sm:$0xf]
        %v305 = vld [vmem:[#allocation5 + $0x144] sm:$0xf]
        %v306 = vld [vmem:[#allocation5 + $0x148] sm:$0xf]
        %v307 = vld [vmem:[#allocation5 + $0x14c] sm:$0xf]
        %v308 = vld [vmem:[#allocation5 + $0x150] sm:$0xf]
        %v309 = vld [vmem:[#allocation5 + $0x154] sm:$0xf]
        %v310 = vld [vmem:[#allocation5 + $0x158] sm:$0xf]
        %v311 = vld [vmem:[#allocation5 + $0x15c] sm:$0xf]
        %v312 = vld [vmem:[#allocation5 + $0x160] sm:$0xf]
        %v313 = vld [vmem:[#allocation5 + $0x164] sm:$0xf]
        %v314 = vld [vmem:[#allocation5 + $0x168] sm:$0xf]
        %v315 = vld [vmem:[#allocation5 + $0x16c] sm:$0xf]
        %v316 = vld [vmem:[#allocation5 + $0x170] sm:$0xf]
        %v317 = vld [vmem:[#allocation5 + $0x174] sm:$0xf]
        %v318 = vld [vmem:[#allocation5 + $0x178] sm:$0xf]
        %v319 = vld [vmem:[#allocation5 + $0x17c] sm:$0xf]
        %v320 = vld [vmem:[#allocation5 + $0x180] sm:$0xf]
        %v321 = vld [vmem:[#allocation5 + $0x184] sm:$0xf]
        %v322 = vld [vmem:[#allocation5 + $0x188] sm:$0xf]
        %v323 = vld [vmem:[#allocation5 + $0x18c] sm:$0xf]
        %v324 = vld [vmem:[#allocation5 + $0x190] sm:$0xf]
        %v325 = vld [vmem:[#allocation5 + $0x194] sm:$0xf]
        %v326 = vld [vmem:[#allocation5 + $0x198] sm:$0xf]
        %v327 = vld [vmem:[#allocation5 + $0x19c] sm:$0xf]
        %v328 = vld [vmem:[#allocation5 + $0x1a0] sm:$0xf]
        %v329 = vld [vmem:[#allocation5 + $0x1a4] sm:$0xf]
        %v330 = vld [vmem:[#allocation5 + $0x1a8] sm:$0xf]
        %v331 = vld [vmem:[#allocation5 + $0x1ac] sm:$0xf]
        %v332 = vld [vmem:[#allocation5 + $0x1b0] sm:$0xf]
        %v333 = vld [vmem:[#allocation5 + $0x1b4] sm:$0xf]
        %v334 = vld [vmem:[#allocation5 + $0x1b8] sm:$0xf]
        %v335 = vld [vmem:[#allocation5 + $0x1bc] sm:$0xf]
        %v336 = vld [vmem:[#allocation5 + $0x1c0] sm:$0xf]
        %v337 = vld [vmem:[#allocation5 + $0x1c4] sm:$0xf]
        %v338 = vld [vmem:[#allocation5 + $0x1c8] sm:$0xf]
        %v339 = vld [vmem:[#allocation5 + $0x1cc] sm:$0xf]
        %v340 = vld [vmem:[#allocation5 + $0x1d0] sm:$0xf]
        %v341 = vld [vmem:[#allocation5 + $0x1d4] sm:$0xf]
        %v342 = vld [vmem:[#allocation5 + $0x1d8] sm:$0xf]
        %v343 = vld [vmem:[#allocation5 + $0x1dc] sm:$0xf]
        %v344 = vld [vmem:[#allocation5 + $0x1e0] sm:$0xf]
        %v345 = vld [vmem:[#allocation5 + $0x1e4] sm:$0xf]
        %v346 = vld [vmem:[#allocation5 + $0x1e8] sm:$0xf]
        %v347 = vld [vmem:[#allocation5 + $0x1ec] sm:$0xf]
        %v348 = vld [vmem:[#allocation5 + $0x1f0] sm:$0xf]
        %v349 = vld [vmem:[#allocation5 + $0x1f4] sm:$0xf]
        %v350 = vld [vmem:[#allocation5 + $0x1f8] sm:$0xf]
        %v351 = vld [vmem:[#allocation5 + $0x1fc] sm:$0xf]
        %v352 = vld [vmem:[%s2] sm:$0x1]
        %v354 = vlaneseq
        %v355 = vshrl.u32 %v354, 7
        %v356 = vsub.s32 0, %v355
        %v357 = vrot.slane %v352, %v356
        %v375 = vunpack.c.l.b16 %v208
        %v376 = vunpack.c.h.b16 %v208
        %v377 = vunpack.c.l.b16 %v209
        %v378 = vunpack.c.h.b16 %v209
        %v379 = vunpack.c.l.b16 %v210
        %v380 = vunpack.c.h.b16 %v210
        %v381 = vunpack.c.l.b16 %v211
        %v382 = vunpack.c.h.b16 %v211
        %v383 = vunpack.c.l.b16 %v212
        %v384 = vunpack.c.h.b16 %v212
        %v385 = vunpack.c.l.b16 %v213
        %v386 = vunpack.c.h.b16 %v213
        %v387 = vunpack.c.l.b16 %v214
        %v388 = vunpack.c.h.b16 %v214
        %v389 = vunpack.c.l.b16 %v215
        %v390 = vunpack.c.h.b16 %v215
        %v391 = vunpack.c.l.b16 %v216
        %v392 = vunpack.c.h.b16 %v216
        %v393 = vunpack.c.l.b16 %v217
        %v394 = vunpack.c.h.b16 %v217
        %v395 = vunpack.c.l.b16 %v218
        %v396 = vunpack.c.h.b16 %v218
        %v397 = vunpack.c.l.b16 %v219
        %v398 = vunpack.c.h.b16 %v219
        %v399 = vunpack.c.l.b16 %v220
        %v400 = vunpack.c.h.b16 %v220
        %v401 = vunpack.c.l.b16 %v221
        %v402 = vunpack.c.h.b16 %v221
        %v403 = vunpack.c.l.b16 %v222
        %v404 = vunpack.c.h.b16 %v222
        %v405 = vunpack.c.l.b16 %v223
        %v406 = vunpack.c.h.b16 %v223
        %v407 = vpack.c.b16 %v383, %v375
        %v408 = vpack.c.b16 %v384, %v376
        %v409 = vpack.c.b16 %v385, %v377
        %v410 = vpack.c.b16 %v386, %v378
        %v411 = vpack.c.b16 %v387, %v379
        %v412 = vpack.c.b16 %v388, %v380
        %v413 = vpack.c.b16 %v389, %v381
        %v414 = vpack.c.b16 %v390, %v382
        %v415 = vpack.c.b16 %v399, %v391
        %v416 = vpack.c.b16 %v400, %v392
        %v417 = vpack.c.b16 %v401, %v393
        %v418 = vpack.c.b16 %v402, %v394
        %v419 = vpack.c.b16 %v403, %v395
        %v420 = vpack.c.b16 %v404, %v396
        %v421 = vpack.c.b16 %v405, %v397
        %v422 = vpack.c.b16 %v406, %v398
        %v567 = vunpack.c.l.b16 %v224
        %v568 = vunpack.c.l.b16 %v225
        %v569 = vunpack.c.l.b16 %v226
        %v570 = vunpack.c.l.b16 %v227
        %v571 = vunpack.c.l.b16 %v228
        %v572 = vunpack.c.l.b16 %v229
        %v573 = vunpack.c.l.b16 %v230
        %v574 = vunpack.c.l.b16 %v231
        %v575 = vunpack.c.l.b16 %v232
        %v576 = vunpack.c.l.b16 %v233
        %v577 = vunpack.c.l.b16 %v234
        %v578 = vunpack.c.l.b16 %v235
        %v579 = vunpack.c.l.b16 %v236
        %v580 = vunpack.c.l.b16 %v237
        %v581 = vunpack.c.l.b16 %v238
        %v582 = vunpack.c.l.b16 %v239
        %v583 = vunpack.c.l.b16 %v240
        %v584 = vunpack.c.l.b16 %v241
        %v585 = vunpack.c.l.b16 %v242
        %v586 = vunpack.c.l.b16 %v243
        %v587 = vunpack.c.l.b16 %v244
        %v588 = vunpack.c.l.b16 %v245
        %v589 = vunpack.c.l.b16 %v246
        %v590 = vunpack.c.l.b16 %v247
        %v591 = vunpack.c.l.b16 %v248
        %v592 = vunpack.c.l.b16 %v249
        %v593 = vunpack.c.l.b16 %v250
        %v594 = vunpack.c.l.b16 %v251
        %v595 = vunpack.c.l.b16 %v252
        %v596 = vunpack.c.l.b16 %v253
        %v597 = vunpack.c.l.b16 %v254
        %v598 = vunpack.c.l.b16 %v255
        %v599 = vunpack.c.l.b16 %v256
        %v600 = vunpack.c.l.b16 %v257
        %v601 = vunpack.c.l.b16 %v258
        %v602 = vunpack.c.l.b16 %v259
        %v603 = vunpack.c.l.b16 %v260
        %v604 = vunpack.c.l.b16 %v261
        %v605 = vunpack.c.l.b16 %v262
        %v606 = vunpack.c.l.b16 %v263
        %v607 = vunpack.c.l.b16 %v264
        %v608 = vunpack.c.l.b16 %v265
        %v609 = vunpack.c.l.b16 %v266
        %v610 = vunpack.c.l.b16 %v267
        %v611 = vunpack.c.l.b16 %v268
        %v612 = vunpack.c.l.b16 %v269
        %v613 = vunpack.c.l.b16 %v270
        %v614 = vunpack.c.l.b16 %v271
        %v615 = vunpack.c.l.b16 %v272
        %v616 = vunpack.c.l.b16 %v273
        %v617 = vunpack.c.l.b16 %v274
        %v618 = vunpack.c.l.b16 %v275
        %v619 = vunpack.c.l.b16 %v276
        %v620 = vunpack.c.l.b16 %v277
        %v621 = vunpack.c.l.b16 %v278
        %v622 = vunpack.c.l.b16 %v279
        %v623 = vunpack.c.l.b16 %v280
        %v624 = vunpack.c.l.b16 %v281
        %v625 = vunpack.c.l.b16 %v282
        %v626 = vunpack.c.l.b16 %v283
        %v627 = vunpack.c.l.b16 %v284
        %v628 = vunpack.c.l.b16 %v285
        %v629 = vunpack.c.l.b16 %v286
        %v630 = vunpack.c.l.b16 %v287
        %v631 = vunpack.c.l.b16 %v288
        %v632 = vunpack.c.l.b16 %v289
        %v633 = vunpack.c.l.b16 %v290
        %v634 = vunpack.c.l.b16 %v291
        %v635 = vunpack.c.l.b16 %v292
        %v636 = vunpack.c.l.b16 %v293
        %v637 = vunpack.c.l.b16 %v294
        %v638 = vunpack.c.l.b16 %v295
        %v639 = vunpack.c.l.b16 %v296
        %v640 = vunpack.c.l.b16 %v297
        %v641 = vunpack.c.l.b16 %v298
        %v642 = vunpack.c.l.b16 %v299
        %v643 = vunpack.c.l.b16 %v300
        %v644 = vunpack.c.l.b16 %v301
        %v645 = vunpack.c.l.b16 %v302
        %v646 = vunpack.c.l.b16 %v303
        %v647 = vunpack.c.l.b16 %v304
        %v648 = vunpack.c.l.b16 %v305
        %v649 = vunpack.c.l.b16 %v306
        %v650 = vunpack.c.l.b16 %v307
        %v651 = vunpack.c.l.b16 %v308
        %v652 = vunpack.c.l.b16 %v309
        %v653 = vunpack.c.l.b16 %v310
        %v654 = vunpack.c.l.b16 %v311
        %v655 = vunpack.c.l.b16 %v312
        %v656 = vunpack.c.l.b16 %v313
        %v657 = vunpack.c.l.b16 %v314
        %v658 = vunpack.c.l.b16 %v315
        %v659 = vunpack.c.l.b16 %v316
        %v660 = vunpack.c.l.b16 %v317
        %v661 = vunpack.c.l.b16 %v318
        %v662 = vunpack.c.l.b16 %v319
        %v663 = vunpack.c.l.b16 %v320
        %v664 = vunpack.c.l.b16 %v321
        %v665 = vunpack.c.l.b16 %v322
        %v666 = vunpack.c.l.b16 %v323
        %v667 = vunpack.c.l.b16 %v324
        %v668 = vunpack.c.l.b16 %v325
        %v669 = vunpack.c.l.b16 %v326
        %v670 = vunpack.c.l.b16 %v327
        %v671 = vunpack.c.l.b16 %v328
        %v672 = vunpack.c.l.b16 %v329
        %v673 = vunpack.c.l.b16 %v330
        %v674 = vunpack.c.l.b16 %v331
        %v675 = vunpack.c.l.b16 %v332
        %v676 = vunpack.c.l.b16 %v333
        %v677 = vunpack.c.l.b16 %v334
        %v678 = vunpack.c.l.b16 %v335
        %v679 = vunpack.c.l.b16 %v336
        %v680 = vunpack.c.l.b16 %v337
        %v681 = vunpack.c.l.b16 %v338
        %v682 = vunpack.c.l.b16 %v339
        %v683 = vunpack.c.l.b16 %v340
        %v684 = vunpack.c.l.b16 %v341
        %v685 = vunpack.c.l.b16 %v342
        %v686 = vunpack.c.l.b16 %v343
        %v687 = vunpack.c.l.b16 %v344
        %v688 = vunpack.c.l.b16 %v345
        %v689 = vunpack.c.l.b16 %v346
        %v690 = vunpack.c.l.b16 %v347
        %v691 = vunpack.c.l.b16 %v348
        %v692 = vunpack.c.l.b16 %v349
        %v693 = vunpack.c.l.b16 %v350
        %v694 = vunpack.c.l.b16 %v351
        %v695 = vpack.c.b16 %v568, %v567
        %v696 = vpack.c.b16 %v570, %v569
        %v697 = vpack.c.b16 %v572, %v571
        %v698 = vpack.c.b16 %v574, %v573
        %v699 = vpack.c.b16 %v576, %v575
        %v700 = vpack.c.b16 %v578, %v577
        %v701 = vpack.c.b16 %v580, %v579
        %v702 = vpack.c.b16 %v582, %v581
        %v703 = vpack.c.b16 %v584, %v583
        %v704 = vpack.c.b16 %v586, %v585
        %v705 = vpack.c.b16 %v588, %v587
        %v706 = vpack.c.b16 %v590, %v589
        %v707 = vpack.c.b16 %v592, %v591
        %v708 = vpack.c.b16 %v594, %v593
        %v709 = vpack.c.b16 %v596, %v595
        %v710 = vpack.c.b16 %v598, %v597
        %v711 = vpack.c.b16 %v600, %v599
        %v712 = vpack.c.b16 %v602, %v601
        %v713 = vpack.c.b16 %v604, %v603
        %v714 = vpack.c.b16 %v606, %v605
        %v715 = vpack.c.b16 %v608, %v607
        %v716 = vpack.c.b16 %v610, %v609
        %v717 = vpack.c.b16 %v612, %v611
        %v718 = vpack.c.b16 %v614, %v613
        %v719 = vpack.c.b16 %v616, %v615
        %v720 = vpack.c.b16 %v618, %v617
        %v721 = vpack.c.b16 %v620, %v619
        %v722 = vpack.c.b16 %v622, %v621
        %v723 = vpack.c.b16 %v624, %v623
        %v724 = vpack.c.b16 %v626, %v625
        %v725 = vpack.c.b16 %v628, %v627
        %v726 = vpack.c.b16 %v630, %v629
        %v727 = vpack.c.b16 %v632, %v631
        %v728 = vpack.c.b16 %v634, %v633
        %v729 = vpack.c.b16 %v636, %v635
        %v730 = vpack.c.b16 %v638, %v637
        %v731 = vpack.c.b16 %v640, %v639
        %v732 = vpack.c.b16 %v642, %v641
        %v733 = vpack.c.b16 %v644, %v643
        %v734 = vpack.c.b16 %v646, %v645
        %v735 = vpack.c.b16 %v648, %v647
        %v736 = vpack.c.b16 %v650, %v649
        %v737 = vpack.c.b16 %v652, %v651
        %v738 = vpack.c.b16 %v654, %v653
        %v739 = vpack.c.b16 %v656, %v655
        %v740 = vpack.c.b16 %v658, %v657
        %v741 = vpack.c.b16 %v660, %v659
        %v742 = vpack.c.b16 %v662, %v661
        %v743 = vpack.c.b16 %v664, %v663
        %v744 = vpack.c.b16 %v666, %v665
        %v745 = vpack.c.b16 %v668, %v667
        %v746 = vpack.c.b16 %v670, %v669
        %v747 = vpack.c.b16 %v672, %v671
        %v748 = vpack.c.b16 %v674, %v673
        %v749 = vpack.c.b16 %v676, %v675
        %v750 = vpack.c.b16 %v678, %v677
        %v751 = vpack.c.b16 %v680, %v679
        %v752 = vpack.c.b16 %v682, %v681
        %v753 = vpack.c.b16 %v684, %v683
        %v754 = vpack.c.b16 %v686, %v685
        %v755 = vpack.c.b16 %v688, %v687
        %v756 = vpack.c.b16 %v690, %v689
        %v757 = vpack.c.b16 %v692, %v691
        %v758 = vpack.c.b16 %v694, %v693
        %823 = vmatprep.subr.bf16.mxu0 0
        %824 = vmatpush1.bf16.msra.mxu0 %v702
        %825 = vmatprep.subr.bf16.mxu0 0
        %826 = vmatpush1.bf16.msra.mxu0 %v701
        %827 = vmatprep.subr.bf16.mxu0 0
        %828 = vmatpush1.bf16.msra.mxu0 %v700
        %829 = vmatprep.subr.bf16.mxu0 0
        %830 = vmatpush1.bf16.msra.mxu0 %v699
        %831 = vmatprep.subr.bf16.mxu0 0
        %832 = vmatpush1.bf16.msra.mxu0 %v698
        %833 = vmatprep.subr.bf16.mxu0 0
        %834 = vmatpush1.bf16.msra.mxu0 %v697
        %835 = vmatprep.subr.bf16.mxu0 0
        %836 = vmatpush1.bf16.msra.mxu0 %v696
        %837 = vmatprep.subr.bf16.mxu0 0
        %838 = vmatpush1.bf16.msra.mxu0 %v695
        %839 = vmatprep.subr.bf16.mxu0 0
        %840 = vmatpush2.bf16.msra.mxu0 %v710
        %841 = vmatprep.subr.bf16.mxu0 0
        %842 = vmatpush2.bf16.msra.mxu0 %v709
        %843 = vmatprep.subr.bf16.mxu0 0
        %844 = vmatpush2.bf16.msra.mxu0 %v708
        %845 = vmatprep.subr.bf16.mxu0 0
        %846 = vmatpush2.bf16.msra.mxu0 %v707
        %847 = vmatprep.subr.bf16.mxu0 0
        %848 = vmatpush2.bf16.msra.mxu0 %v706
        %849 = vmatprep.subr.bf16.mxu0 0
        %850 = vmatpush2.bf16.msra.mxu0 %v705
        %851 = vmatprep.subr.bf16.mxu0 0
        %852 = vmatpush2.bf16.msra.mxu0 %v704
        %853 = vmatprep.subr.bf16.mxu0 0
        %854 = vmatpush2.bf16.msra.mxu0 %v703
        %855 = vmatprep.mubr.bf16.mxu0 %v408
        %856 = vmatmul.mubr.bf16.gmra.mxu0 %v407
        %v857 = vpop.f32.mrf.mxu0
        %v858 = vadd.f32 %v357, %v857
        %v859 = vpop.f32.mrf.mxu0
        %v860 = vpop.f32.mrf.mxu0
        %v861 = vadd.f32 %v357, %v860
        %v862 = vpop.f32.mrf.mxu0
        %863 = vmatprep.mubr.bf16.mxu0 %v416
        %864 = vmatmul.mubr.bf16.gmra.mxu0 %v415
        %v865 = vpop.f32.mrf.mxu0
        %v866 = vadd.f32 %v357, %v865
        %v867 = vpop.f32.mrf.mxu0
        %v868 = vpop.f32.mrf.mxu0
        %v869 = vadd.f32 %v357, %v868
        %v870 = vpop.f32.mrf.mxu0
        %871 = vdwg.mxu0
        %872 = vmatprep.subr.bf16.mxu0 0
        %873 = vmatpush1.bf16.msra.mxu0 %v718
        %874 = vmatprep.subr.bf16.mxu0 0
        %875 = vmatpush1.bf16.msra.mxu0 %v717
        %876 = vmatprep.subr.bf16.mxu0 0
        %877 = vmatpush1.bf16.msra.mxu0 %v716
        %878 = vmatprep.subr.bf16.mxu0 0
        %879 = vmatpush1.bf16.msra.mxu0 %v715
        %880 = vmatprep.subr.bf16.mxu0 0
        %881 = vmatpush1.bf16.msra.mxu0 %v714
        %882 = vmatprep.subr.bf16.mxu0 0
        %883 = vmatpush1.bf16.msra.mxu0 %v713
        %884 = vmatprep.subr.bf16.mxu0 0
        %885 = vmatpush1.bf16.msra.mxu0 %v712
        %886 = vmatprep.subr.bf16.mxu0 0
        %887 = vmatpush1.bf16.msra.mxu0 %v711
        %888 = vmatprep.subr.bf16.mxu0 0
        %889 = vmatpush2.bf16.msra.mxu0 %v726
        %890 = vmatprep.subr.bf16.mxu0 0
        %891 = vmatpush2.bf16.msra.mxu0 %v725
        %892 = vmatprep.subr.bf16.mxu0 0
        %893 = vmatpush2.bf16.msra.mxu0 %v724
        %894 = vmatprep.subr.bf16.mxu0 0
        %895 = vmatpush2.bf16.msra.mxu0 %v723
        %896 = vmatprep.subr.bf16.mxu0 0
        %897 = vmatpush2.bf16.msra.mxu0 %v722
        %898 = vmatprep.subr.bf16.mxu0 0
        %899 = vmatpush2.bf16.msra.mxu0 %v721
        %900 = vmatprep.subr.bf16.mxu0 0
        %901 = vmatpush2.bf16.msra.mxu0 %v720
        %902 = vmatprep.subr.bf16.mxu0 0
        %903 = vmatpush2.bf16.msra.mxu0 %v719
        %904 = vmatprep.mubr.bf16.mxu0 %v410
        %905 = vmatmul.mubr.bf16.gmra.mxu0 %v409
        %v906 = vpop.f32.mrf.mxu0
        %v907 = vadd.f32 %v858, %v906
        %v908 = vpop.f32.mrf.mxu0
        %v909 = vpop.f32.mrf.mxu0
        %v910 = vadd.f32 %v861, %v909
        %v911 = vpop.f32.mrf.mxu0
        %912 = vmatprep.mubr.bf16.mxu0 %v418
        %913 = vmatmul.mubr.bf16.gmra.mxu0 %v417
        %v914 = vpop.f32.mrf.mxu0
        %v915 = vadd.f32 %v866, %v914
        %v916 = vpop.f32.mrf.mxu0
        %v917 = vpop.f32.mrf.mxu0
        %v918 = vadd.f32 %v869, %v917
        %v919 = vpop.f32.mrf.mxu0
        %920 = vdwg.mxu0
        %921 = vmatprep.subr.bf16.mxu0 0
        %922 = vmatpush1.bf16.msra.mxu0 %v734
        %923 = vmatprep.subr.bf16.mxu0 0
        %924 = vmatpush1.bf16.msra.mxu0 %v733
        %925 = vmatprep.subr.bf16.mxu0 0
        %926 = vmatpush1.bf16.msra.mxu0 %v732
        %927 = vmatprep.subr.bf16.mxu0 0
        %928 = vmatpush1.bf16.msra.mxu0 %v731
        %929 = vmatprep.subr.bf16.mxu0 0
        %930 = vmatpush1.bf16.msra.mxu0 %v730
        %931 = vmatprep.subr.bf16.mxu0 0
        %932 = vmatpush1.bf16.msra.mxu0 %v729
        %933 = vmatprep.subr.bf16.mxu0 0
        %934 = vmatpush1.bf16.msra.mxu0 %v728
        %935 = vmatprep.subr.bf16.mxu0 0
        %936 = vmatpush1.bf16.msra.mxu0 %v727
        %937 = vmatprep.subr.bf16.mxu0 0
        %938 = vmatpush2.bf16.msra.mxu0 %v742
        %939 = vmatprep.subr.bf16.mxu0 0
        %940 = vmatpush2.bf16.msra.mxu0 %v741
        %941 = vmatprep.subr.bf16.mxu0 0
        %942 = vmatpush2.bf16.msra.mxu0 %v740
        %943 = vmatprep.subr.bf16.mxu0 0
        %944 = vmatpush2.bf16.msra.mxu0 %v739
        %945 = vmatprep.subr.bf16.mxu0 0
        %946 = vmatpush2.bf16.msra.mxu0 %v738
        %947 = vmatprep.subr.bf16.mxu0 0
        %948 = vmatpush2.bf16.msra.mxu0 %v737
        %949 = vmatprep.subr.bf16.mxu0 0
        %950 = vmatpush2.bf16.msra.mxu0 %v736
        %951 = vmatprep.subr.bf16.mxu0 0
        %952 = vmatpush2.bf16.msra.mxu0 %v735
        %953 = vmatprep.mubr.bf16.mxu0 %v412
        %954 = vmatmul.mubr.bf16.gmra.mxu0 %v411
        %v955 = vpop.f32.mrf.mxu0
        %v956 = vadd.f32 %v907, %v955
        %v957 = vpop.f32.mrf.mxu0
        %v958 = vpop.f32.mrf.mxu0
        %v959 = vadd.f32 %v910, %v958
        %v960 = vpop.f32.mrf.mxu0
        %961 = vmatprep.mubr.bf16.mxu0 %v420
        %962 = vmatmul.mubr.bf16.gmra.mxu0 %v419
        %v963 = vpop.f32.mrf.mxu0
        %v964 = vadd.f32 %v915, %v963
        %v965 = vpop.f32.mrf.mxu0
        %v966 = vpop.f32.mrf.mxu0
        %v967 = vadd.f32 %v918, %v966
        %v968 = vpop.f32.mrf.mxu0
        %969 = vdwg.mxu0
        %970 = vmatprep.subr.bf16.mxu0 0
        %971 = vmatpush1.bf16.msra.mxu0 %v750
        %972 = vmatprep.subr.bf16.mxu0 0
        %973 = vmatpush1.bf16.msra.mxu0 %v749
        %974 = vmatprep.subr.bf16.mxu0 0
        %975 = vmatpush1.bf16.msra.mxu0 %v748
        %976 = vmatprep.subr.bf16.mxu0 0
        %977 = vmatpush1.bf16.msra.mxu0 %v747
        %978 = vmatprep.subr.bf16.mxu0 0
        %979 = vmatpush1.bf16.msra.mxu0 %v746
        %980 = vmatprep.subr.bf16.mxu0 0
        %981 = vmatpush1.bf16.msra.mxu0 %v745
        %982 = vmatprep.subr.bf16.mxu0 0
        %983 = vmatpush1.bf16.msra.mxu0 %v744
        %984 = vmatprep.subr.bf16.mxu0 0
        %985 = vmatpush1.bf16.msra.mxu0 %v743
        %986 = vmatprep.subr.bf16.mxu0 0
        %987 = vmatpush2.bf16.msra.mxu0 %v758
        %988 = vmatprep.subr.bf16.mxu0 0
        %989 = vmatpush2.bf16.msra.mxu0 %v757
        %990 = vmatprep.subr.bf16.mxu0 0
        %991 = vmatpush2.bf16.msra.mxu0 %v756
        %992 = vmatprep.subr.bf16.mxu0 0
        %993 = vmatpush2.bf16.msra.mxu0 %v755
        %994 = vmatprep.subr.bf16.mxu0 0
        %995 = vmatpush2.bf16.msra.mxu0 %v754
        %996 = vmatprep.subr.bf16.mxu0 0
        %997 = vmatpush2.bf16.msra.mxu0 %v753
        %998 = vmatprep.subr.bf16.mxu0 0
        %999 = vmatpush2.bf16.msra.mxu0 %v752
        %1000 = vmatprep.subr.bf16.mxu0 0
        %1001 = vmatpush2.bf16.msra.mxu0 %v751
        %1002 = vmatprep.mubr.bf16.mxu0 %v414
        %1003 = vmatmul.mubr.bf16.gmra.mxu0 %v413
        %v1004 = vpop.f32.mrf.mxu0
        %v1005 = vadd.f32 %v956, %v1004
        %v1006 = vpop.f32.mrf.mxu0
        %v1007 = vpop.f32.mrf.mxu0
        %v1008 = vadd.f32 %v959, %v1007
        %v1009 = vpop.f32.mrf.mxu0
        %1010 = vmatprep.mubr.bf16.mxu0 %v422
        %1011 = vmatmul.mubr.bf16.gmra.mxu0 %v421
        %v1012 = vpop.f32.mrf.mxu0
        %v1013 = vadd.f32 %v964, %v1012
        %v1014 = vpop.f32.mrf.mxu0
        %v1015 = vpop.f32.mrf.mxu0
        %v1016 = vadd.f32 %v967, %v1015
        %v1017 = vpop.f32.mrf.mxu0
        %1018 = vdwg.mxu0
        %1019 = vst [vmem:[%s204] sm:$0xff] %v1005
        %1020 = vst [vmem:[%s204 + $0x8] sm:$0xff] %v1008
        %1021 = vst [vmem:[%s204 + $0x10] sm:$0xff] %v1013
        %1022 = vst [vmem:[%s204 + $0x18] sm:$0xff] %v1016
        %s1023 = sand.u32 %s97, 1
        %s1024 = scalar_lea.sflag [#allocation4], %s1023
        %s1025 = sand.u32 %s97, 1
        %s1026 = smul.addr %s1025, 32
        %s1027 = scalar_lea.vmem [#allocation7], %s1026
        // Predicated region
        $region41: #{tpu_custom_call.1} parent=31 // pred_check
          %p1028 = pneg %p107
        $region42: #{tpu_custom_call.1} parent=31 // pred_check_branch
          %1030 = sbr.rel (%p1028) target = $region44
        $region43: #{tpu_custom_call.1} parent=31 // pred_region
          %s1031 = smul.u32 4, %s21
          %s1033 = ssub.s32 512, 512
          %1034 = vsyncadd %s1024, %s1033
          %s1035 = smul.addr %s1031, 128
          %s1036 = scalar_lea.hbm %s3, %s1035
          %s1037 = sshll.u32 %s1027, 4
          %s1038 = int_to_ptr.vmem [resolvable:$true] %s1037
          %1043 = dma.vmem_to_hbm [thread:$0]  %s1038, 512, %s1036, %s1024, 128, 128, 8
        $region44: #{tpu_custom_call.1} parent=31 // pred_fallthru
          _
      $region32: #{tpu_custom_call.1} parent=5 // pred_fallthru
        _
      %p1044 = scmp.le.s32.totalorder 2, %s16
      // Predicated region
      $region45: #{tpu_custom_call.1} parent=5 // pred_check
        %p1045 = pneg %p1044
      $region46: #{tpu_custom_call.1} parent=5 // pred_check_branch
        %1047 = sbr.rel (%p1045) target = $region48
      $region47: #{tpu_custom_call.1} parent=5 // pred_region
        %s1048 = ssub.s32 %s16, 2
        // Predicated region
        $region49: #{tpu_custom_call.1} parent=47 // pred_check
          %p1049 = pneg %p113
        $region50: #{tpu_custom_call.1} parent=47 // pred_check_branch
          %1051 = sbr.rel (%p1049) target = $region52
        $region51: #{tpu_custom_call.1} parent=47 // pred_region
          %s1052 = sand.u32 %s98, 1
          %s1053 = scalar_lea.sflag [#allocation4], %s1052
          %s1054 = sand.u32 %s98, 1
          %s1055 = smul.addr %s1054, 32
          %s1056 = scalar_lea.vmem [#allocation7], %s1055
          %1057 = dma.done %s1053, 512
        $region52: #{tpu_custom_call.1} parent=47 // pred_fallthru
          _
      $region48: #{tpu_custom_call.1} parent=5 // pred_fallthru
        _
    $region6: #{tpu_custom_call.1} parent=1 // loop_footer
      %s20 = sadd.s32 1, %s16
    $region7: #{tpu_custom_call.1} parent=1 // loop_footer_branch
      %15 = sbr.rel target = $region3
    $region8: #{tpu_custom_call.1} parent=1 // loop_exit
      _
    %1058 = vsyncpa [#allocation3], 1
    %s1059 = scalar_lea.sflag [#allocation3], 1
    %1060 = vsyncpa %s1059, 1
    %1061 = vsyncpa [#allocation6], 1
    %1062 = vsyncpa [#allocation4], 1
    %s1063 = scalar_lea.sflag [#allocation4], 1
    %1064 = vsyncpa %s1063, 1

</llo_original>
